<compile_context>
chip_gen: v7x
topology: tpu7x:2x2x1
jax: 0.10.0
libtpu: 0.0.40
codegen_flags: <defaults>
</compile_context>

<pallas_src>
import math

import jax
import jax.numpy as jnp
from jax.experimental import pallas as pl
from jax.experimental.pallas import tpu as pltpu  # noqa: F401  (TPU backend)


BN_EPS = 1e-5
LANE = 128


def _round_up(n, m):
    return ((n + m - 1) // m) * m


def _full_spec(shape):
    # Single grid point, block == full array.
    return pl.BlockSpec(shape, lambda: (0,) * len(shape))


def _make_fused_kernel(num_hidden, batch, p):
    """Kernel for: num_hidden x (Linear -> ReLU -> BN) -> Linear.

    Refs:
      x_ref   : (B, P)        zero-padded input activation
      w_ref   : (L+1, P, P)   pre-transposed, zero-padded weights
      vec_ref : (8, P)        rows [3i]=b_i, [3i+1]=gamma_i, [3i+2]=beta_i, [3L]=b_final
      out_ref : (B, (3L+1)*P) lane-dense output slab
    """
    inv_b = 1.0 / float(batch)

    def kernel(x_ref, w_ref, vec_ref, out_ref):
        vec = vec_ref[...]                      # (8, P) -- one tiny load
        h = x_ref[...]                          # (B, P), stays on-chip all layers
        for i in range(num_hidden):
            w = w_ref[i]                        # (P, P)
            b = vec[3 * i:3 * i + 1]            # (1, P)
            gamma = vec[3 * i + 1:3 * i + 2]
            beta = vec[3 * i + 2:3 * i + 3]

            # Linear (padded cols of w / b are zero, so padded lanes stay 0).
            z = jnp.dot(h, w, preferred_element_type=jnp.float32) + b
            out_ref[:, (3 * i) * p:(3 * i) * p + p] = z          # post_lins[i]

            # ReLU
            r = jnp.maximum(z, 0.0)
            out_ref[:, (3 * i + 1) * p:(3 * i + 1) * p + p] = r  # pre_bns[i]

            # BatchNorm1d (training-mode batch stats), single fused reduction
            # over [r | r*r], affine folded into per-feature scale/shift.
            s = jnp.sum(jnp.concatenate([r, r * r], axis=1),
                        axis=0, keepdims=True)                   # (1, 2P)
            mean = s[:, :p] * inv_b
            var = jnp.maximum(s[:, p:] * inv_b - mean * mean, 0.0)
            scale = gamma * jax.lax.rsqrt(var + BN_EPS)          # (1, P), EUP
            shift = beta - mean * scale                          # (1, P)
            h = r * scale + shift                                # 2 VPU passes
            out_ref[:, (3 * i + 2) * p:(3 * i + 2) * p + p] = h  # hs[i]

        wf = w_ref[num_hidden]
        bf = vec[3 * num_hidden:3 * num_hidden + 1]
        y = jnp.dot(h, wf, preferred_element_type=jnp.float32) + bf
        out_ref[:, (3 * num_hidden) * p:(3 * num_hidden) * p + p] = y

    return kernel


def fused_forward(x_pad, w_slab, vec_slab):
    """One pallas_call for the whole MLP forward. Returns the packed output slab."""
    B, P = x_pad.shape
    num_hidden = w_slab.shape[0] - 1
    n_seg = 3 * num_hidden + 1

    flops = 2 * B * P * P * (num_hidden + 1)
    transcendentals = num_hidden * P                     # rsqrt per (padded) feature
    bytes_accessed = 4 * (x_pad.size + w_slab.size + vec_slab.size + B * n_seg * P)

    return pl.pallas_call(
        _make_fused_kernel(num_hidden, B, P),
        out_shape=jax.ShapeDtypeStruct((B, n_seg * P), jnp.float32),
        in_specs=[
            _full_spec((B, P)),
            _full_spec(w_slab.shape),
            _full_spec(vec_slab.shape),
        ],
        out_specs=_full_spec((B, n_seg * P)),
        cost_estimate=pl.CostEstimate(
            flops=flops,
            transcendentals=transcendentals,
            bytes_accessed=bytes_accessed,
        ),
    )(x_pad, w_slab, vec_slab)


def init_params(key, d, ks, d_output):
    """Deterministic init matching the module's shapes; packs padded slabs once."""
    dims = [d] + list(ks) + [d_output]
    P = max(_round_up(v, LANE) for v in dims)
    L = len(ks)

    hidden = []
    last_k = d
    for k in ks:
        key, kw, kb = jax.random.split(key, 3)
        bound = 1.0 / math.sqrt(last_k)
        w = jax.random.uniform(kw, (k, last_k), jnp.float32, -bound, bound)  # (out, in)
        b = jax.random.uniform(kb, (k,), jnp.float32, -bound, bound)
        hidden.append(dict(
            w=w, b=b,
            gamma=jnp.ones((k,), jnp.float32),   # BatchNorm1d affine defaults
            beta=jnp.zeros((k,), jnp.float32),
        ))
        last_k = k
    key, kw, kb = jax.random.split(key, 3)
    bound = 1.0 / math.sqrt(last_k)
    wf = jax.random.uniform(kw, (d_output, last_k), jnp.float32, -bound, bound)
    bf = jax.random.uniform(kb, (d_output,), jnp.float32, -bound, bound)
    final = dict(w=wf, b=bf)

    # Pack once at init (never inside the jitted forward):
    #  * weights pre-transposed to (in, out), zero-padded into (L+1, P, P),
    #  * b/gamma/beta per layer + final bias into an (8, P) row slab.
    w_slab = jnp.zeros((L + 1, P, P), jnp.float32)
    vec_slab = jnp.zeros((_round_up(3 * L + 1, 8), P), jnp.float32)
    last_k = d
    for i, layer in enumerate(hidden):
        k = layer["w"].shape[0]
        w_slab = w_slab.at[i, :last_k, :k].set(layer["w"].T)
        vec_slab = vec_slab.at[3 * i, :k].set(layer["b"])
        vec_slab = vec_slab.at[3 * i + 1, :k].set(layer["gamma"])
        vec_slab = vec_slab.at[3 * i + 2, :k].set(layer["beta"])
        last_k = k
    w_slab = w_slab.at[L, :last_k, :d_output].set(wf.T)
    vec_slab = vec_slab.at[3 * L, :d_output].set(bf)

    return dict(hidden=hidden, final=final,
                packed=dict(w_slab=w_slab, vec_slab=vec_slab))


@jax.jit
def model_forward(params, x):
    """Replicates Model.forward: returns dict(hs, post_lins, pre_bns, y)."""
    hidden = params["hidden"]
    L = len(hidden)
    w_slab = params["packed"]["w_slab"]
    vec_slab = params["packed"]["vec_slab"]
    P = w_slab.shape[-1]
    B, d = x.shape

    x_pad = jnp.pad(x, ((0, 0), (0, P - d))) if d != P else x
    slab = fused_forward(x_pad, w_slab, vec_slab)

    ks = [layer["w"].shape[0] for layer in hidden]
    d_out = params["final"]["w"].shape[0]
    post_lins = [slab[:, (3 * i) * P:(3 * i) * P + ks[i]] for i in range(L)]
    pre_bns = [slab[:, (3 * i + 1) * P:(3 * i + 1) * P + ks[i]] for i in range(L)]
    hs = [slab[:, (3 * i + 2) * P:(3 * i + 2) * P + ks[i]] for i in range(L)]
    y = slab[:, (3 * L) * P:(3 * L) * P + d_out]
    return dict(hs=hs, post_lins=post_lins, pre_bns=pre_bns, y=y)


def _reference_forward(params, x):
    """Pure-JAX reference (PyTorch-style two-pass BN) for correctness check."""
    hs, post_lins, pre_bns = [], [], []
    h = x
    for p in params["hidden"]:
        z = h @ p["w"].T + p["b"]
        post_lins.append(z)
        r = jnp.maximum(z, 0.0)
        pre_bns.append(r)
        mean = jnp.mean(r, axis=0, keepdims=True)
        var = jnp.mean((r - mean) ** 2, axis=0, keepdims=True)
        h = (r - mean) / jnp.sqrt(var + BN_EPS) * p["gamma"] + p["beta"]
        hs.append(h)
    y = hs[-1] @ params["final"]["w"].T + params["final"]["b"]
    return dict(hs=hs, post_lins=post_lins, pre_bns=pre_bns, y=y)


if __name__ == "__main__":
    # Small shapes consistent with the module: d=32 input dim, two hidden layers, 8 outputs.
    B, d, ks, d_output = 16, 32, [64, 32], 8

    key = jax.random.PRNGKey(0)
    key, kx, kp = jax.random.split(key, 3)
    x = jax.random.normal(kx, (B, d), jnp.float32)
    params = init_params(kp, d, ks, d_output)

    out = model_forward(params, x)
    jax.block_until_ready(out)

    # Shape checks.
    assert out["y"].shape == (B, d_output)
    assert len(out["hs"]) == len(ks)
    assert out["hs"][0].shape == (B, ks[0])
    assert out["post_lins"][1].shape == (B, ks[1])
    assert out["pre_bns"][1].shape == (B, ks[1])

    # Numerical check against a pure-JAX reference.
    ref = _reference_forward(params, x)
    assert jnp.allclose(out["y"], ref["y"], atol=1e-4, rtol=1e-4)
    for a, b_ in zip(out["hs"], ref["hs"]):
        assert jnp.allclose(a, b_, atol=1e-4, rtol=1e-4)
    for a, b_ in zip(out["post_lins"], ref["post_lins"]):
        assert jnp.allclose(a, b_, atol=1e-4, rtol=1e-4)
    for a, b_ in zip(out["pre_bns"], ref["pre_bns"]):
        assert jnp.allclose(a, b_, atol=1e-4, rtol=1e-4)

    print("KERNEL_OK")
</pallas_src>

<mosaic_0001>
module attributes {stable_mosaic.version = 11 : i64} {
  func.func @kernel(%arg0: memref<16x128xf32, #tpu.memory_space<vmem>>, %arg1: memref<3x128x128xf32, #tpu.memory_space<vmem>>, %arg2: memref<8x128xf32, #tpu.memory_space<vmem>>, %arg3: memref<16x896xf32, #tpu.memory_space<vmem>>) attributes {dimension_semantics = [], scalar_prefetch = 0 : i64, scratch_operands = 0 : i64, tpu.core_type = #tpu.core_type<tc>} {
    %c0 = arith.constant 0 : index
    %c0_0 = arith.constant 0 : index
    %0 = vector.load %arg2[%c0, %c0_0] : memref<8x128xf32, #tpu.memory_space<vmem>>, vector<8x128xf32>
    %c0_1 = arith.constant 0 : index
    %c0_2 = arith.constant 0 : index
    %1 = vector.load %arg0[%c0_1, %c0_2] : memref<16x128xf32, #tpu.memory_space<vmem>>, vector<16x128xf32>
    %c0_3 = arith.constant 0 : index
    %c0_4 = arith.constant 0 : index
    %c0_5 = arith.constant 0 : index
    %2 = vector.load %arg1[%c0_3, %c0_4, %c0_5] : memref<3x128x128xf32, #tpu.memory_space<vmem>>, vector<1x128x128xf32>
    %3 = vector.shape_cast %2 : vector<1x128x128xf32> to vector<128x128xf32>
    %4 = vector.extract_strided_slice %0 {offsets = [0, 0], sizes = [1, 128], strides = [1, 1]} : vector<8x128xf32> to vector<1x128xf32>
    %5 = vector.extract_strided_slice %0 {offsets = [1, 0], sizes = [1, 128], strides = [1, 1]} : vector<8x128xf32> to vector<1x128xf32>
    %6 = vector.extract_strided_slice %0 {offsets = [2, 0], sizes = [1, 128], strides = [1, 1]} : vector<8x128xf32> to vector<1x128xf32>
    %cst = arith.constant dense<0.000000e+00> : vector<16x128xf32>
    %7 = tpu.matmul %1, %3, %cst {dimension_numbers = #tpu.dot_dimension_numbers<[1], [0], [0], [1], [0, 0, 1, 1], [], []>} : vector<16x128xf32>, vector<128x128xf32>, vector<16x128xf32> -> vector<16x128xf32>
    %8 = vector.broadcast %4 : vector<1x128xf32> to vector<16x128xf32>
    %9 = arith.addf %7, %8 : vector<16x128xf32>
    %c0_6 = arith.constant 0 : index
    %c0_7 = arith.constant 0 : index
    %10 = vector.load %arg3[%c0_6, %c0_7] : memref<16x896xf32, #tpu.memory_space<vmem>>, vector<16x128xf32>
    tpu.vector_store %arg3[%c0_6, %c0_7], %9 {strides = array<i32>} : memref<16x896xf32, #tpu.memory_space<vmem>>, vector<16x128xf32>,
    %cst_8 = arith.constant 0.000000e+00 : f32
    %11 = vector.broadcast %cst_8 : f32 to vector<16x128xf32>
    %12 = arith.maximumf %9, %11 : vector<16x128xf32>
    %c0_9 = arith.constant 0 : index
    %c128 = arith.constant 128 : index
    %13 = vector.load %arg3[%c0_9, %c128] : memref<16x896xf32, #tpu.memory_space<vmem>>, vector<16x128xf32>
    tpu.vector_store %arg3[%c0_9, %c128], %12 {strides = array<i32>} : memref<16x896xf32, #tpu.memory_space<vmem>>, vector<16x128xf32>,
    %14 = arith.mulf %12, %12 : vector<16x128xf32>
    %15 = tpu.concatenate %12, %14 in 1 : vector<16x128xf32>, vector<16x128xf32> -> vector<16x256xf32>
    %cst_10 = arith.constant dense<0.000000e+00> : vector<256xf32>
    %16 = vector.multi_reduction <add>, %15, %cst_10 [0] : vector<16x256xf32> to vector<256xf32>
    %17 = vector.shape_cast %16 : vector<256xf32> to vector<1x256xf32>
    %18 = vector.extract_strided_slice %17 {offsets = [0, 0], sizes = [1, 128], strides = [1, 1]} : vector<1x256xf32> to vector<1x128xf32>
    %cst_11 = arith.constant 6.250000e-02 : f32
    %19 = vector.broadcast %cst_11 : f32 to vector<1x128xf32>
    %20 = arith.mulf %18, %19 : vector<1x128xf32>
    %21 = vector.extract_strided_slice %17 {offsets = [0, 128], sizes = [1, 128], strides = [1, 1]} : vector<1x256xf32> to vector<1x128xf32>
    %cst_12 = arith.constant 6.250000e-02 : f32
    %22 = vector.broadcast %cst_12 : f32 to vector<1x128xf32>
    %23 = arith.mulf %21, %22 : vector<1x128xf32>
    %24 = arith.mulf %20, %20 : vector<1x128xf32>
    %25 = arith.subf %23, %24 : vector<1x128xf32>
    %cst_13 = arith.constant 0.000000e+00 : f32
    %26 = vector.broadcast %cst_13 : f32 to vector<1x128xf32>
    %27 = arith.maximumf %25, %26 : vector<1x128xf32>
    %cst_14 = arith.constant 9.99999974E-6 : f32
    %28 = vector.broadcast %cst_14 : f32 to vector<1x128xf32>
    %29 = arith.addf %27, %28 : vector<1x128xf32>
    %30 = math.rsqrt %29 : vector<1x128xf32>
    %31 = arith.mulf %5, %30 : vector<1x128xf32>
    %32 = arith.mulf %20, %31 : vector<1x128xf32>
    %33 = arith.subf %6, %32 : vector<1x128xf32>
    %34 = vector.broadcast %31 : vector<1x128xf32> to vector<16x128xf32>
    %35 = arith.mulf %12, %34 : vector<16x128xf32>
    %36 = vector.broadcast %33 : vector<1x128xf32> to vector<16x128xf32>
    %37 = arith.addf %35, %36 : vector<16x128xf32>
    %c0_15 = arith.constant 0 : index
    %c256 = arith.constant 256 : index
    %38 = vector.load %arg3[%c0_15, %c256] : memref<16x896xf32, #tpu.memory_space<vmem>>, vector<16x128xf32>
    tpu.vector_store %arg3[%c0_15, %c256], %37 {strides = array<i32>} : memref<16x896xf32, #tpu.memory_space<vmem>>, vector<16x128xf32>,
    %c1 = arith.constant 1 : index
    %c0_16 = arith.constant 0 : index
    %c0_17 = arith.constant 0 : index
    %39 = vector.load %arg1[%c1, %c0_16, %c0_17] : memref<3x128x128xf32, #tpu.memory_space<vmem>>, vector<1x128x128xf32>
    %40 = vector.shape_cast %39 : vector<1x128x128xf32> to vector<128x128xf32>
    %41 = vector.extract_strided_slice %0 {offsets = [3, 0], sizes = [1, 128], strides = [1, 1]} : vector<8x128xf32> to vector<1x128xf32>
    %42 = vector.extract_strided_slice %0 {offsets = [4, 0], sizes = [1, 128], strides = [1, 1]} : vector<8x128xf32> to vector<1x128xf32>
    %43 = vector.extract_strided_slice %0 {offsets = [5, 0], sizes = [1, 128], strides = [1, 1]} : vector<8x128xf32> to vector<1x128xf32>
    %cst_18 = arith.constant dense<0.000000e+00> : vector<16x128xf32>
    %44 = tpu.matmul %37, %40, %cst_18 {dimension_numbers = #tpu.dot_dimension_numbers<[1], [0], [0], [1], [0, 0, 1, 1], [], []>} : vector<16x128xf32>, vector<128x128xf32>, vector<16x128xf32> -> vector<16x128xf32>
    %45 = vector.broadcast %41 : vector<1x128xf32> to vector<16x128xf32>
    %46 = arith.addf %44, %45 : vector<16x128xf32>
    %c0_19 = arith.constant 0 : index
    %c384 = arith.constant 384 : index
    %47 = vector.load %arg3[%c0_19, %c384] : memref<16x896xf32, #tpu.memory_space<vmem>>, vector<16x128xf32>
    tpu.vector_store %arg3[%c0_19, %c384], %46 {strides = array<i32>} : memref<16x896xf32, #tpu.memory_space<vmem>>, vector<16x128xf32>,
    %cst_20 = arith.constant 0.000000e+00 : f32
    %48 = vector.broadcast %cst_20 : f32 to vector<16x128xf32>
    %49 = arith.maximumf %46, %48 : vector<16x128xf32>
    %c0_21 = arith.constant 0 : index
    %c512 = arith.constant 512 : index
    %50 = vector.load %arg3[%c0_21, %c512] : memref<16x896xf32, #tpu.memory_space<vmem>>, vector<16x128xf32>
    tpu.vector_store %arg3[%c0_21, %c512], %49 {strides = array<i32>} : memref<16x896xf32, #tpu.memory_space<vmem>>, vector<16x128xf32>,
    %51 = arith.mulf %49, %49 : vector<16x128xf32>
    %52 = tpu.concatenate %49, %51 in 1 : vector<16x128xf32>, vector<16x128xf32> -> vector<16x256xf32>
    %cst_22 = arith.constant dense<0.000000e+00> : vector<256xf32>
    %53 = vector.multi_reduction <add>, %52, %cst_22 [0] : vector<16x256xf32> to vector<256xf32>
    %54 = vector.shape_cast %53 : vector<256xf32> to vector<1x256xf32>
    %55 = vector.extract_strided_slice %54 {offsets = [0, 0], sizes = [1, 128], strides = [1, 1]} : vector<1x256xf32> to vector<1x128xf32>
    %cst_23 = arith.constant 6.250000e-02 : f32
    %56 = vector.broadcast %cst_23 : f32 to vector<1x128xf32>
    %57 = arith.mulf %55, %56 : vector<1x128xf32>
    %58 = vector.extract_strided_slice %54 {offsets = [0, 128], sizes = [1, 128], strides = [1, 1]} : vector<1x256xf32> to vector<1x128xf32>
    %cst_24 = arith.constant 6.250000e-02 : f32
    %59 = vector.broadcast %cst_24 : f32 to vector<1x128xf32>
    %60 = arith.mulf %58, %59 : vector<1x128xf32>
    %61 = arith.mulf %57, %57 : vector<1x128xf32>
    %62 = arith.subf %60, %61 : vector<1x128xf32>
    %cst_25 = arith.constant 0.000000e+00 : f32
    %63 = vector.broadcast %cst_25 : f32 to vector<1x128xf32>
    %64 = arith.maximumf %62, %63 : vector<1x128xf32>
    %cst_26 = arith.constant 9.99999974E-6 : f32
    %65 = vector.broadcast %cst_26 : f32 to vector<1x128xf32>
    %66 = arith.addf %64, %65 : vector<1x128xf32>
    %67 = math.rsqrt %66 : vector<1x128xf32>
    %68 = arith.mulf %42, %67 : vector<1x128xf32>
    %69 = arith.mulf %57, %68 : vector<1x128xf32>
    %70 = arith.subf %43, %69 : vector<1x128xf32>
    %71 = vector.broadcast %68 : vector<1x128xf32> to vector<16x128xf32>
    %72 = arith.mulf %49, %71 : vector<16x128xf32>
    %73 = vector.broadcast %70 : vector<1x128xf32> to vector<16x128xf32>
    %74 = arith.addf %72, %73 : vector<16x128xf32>
    %c0_27 = arith.constant 0 : index
    %c640 = arith.constant 640 : index
    %75 = vector.load %arg3[%c0_27, %c640] : memref<16x896xf32, #tpu.memory_space<vmem>>, vector<16x128xf32>
    tpu.vector_store %arg3[%c0_27, %c640], %74 {strides = array<i32>} : memref<16x896xf32, #tpu.memory_space<vmem>>, vector<16x128xf32>,
    %c2 = arith.constant 2 : index
    %c0_28 = arith.constant 0 : index
    %c0_29 = arith.constant 0 : index
    %76 = vector.load %arg1[%c2, %c0_28, %c0_29] : memref<3x128x128xf32, #tpu.memory_space<vmem>>, vector<1x128x128xf32>
    %77 = vector.shape_cast %76 : vector<1x128x128xf32> to vector<128x128xf32>
    %78 = vector.extract_strided_slice %0 {offsets = [6, 0], sizes = [1, 128], strides = [1, 1]} : vector<8x128xf32> to vector<1x128xf32>
    %cst_30 = arith.constant dense<0.000000e+00> : vector<16x128xf32>
    %79 = tpu.matmul %74, %77, %cst_30 {dimension_numbers = #tpu.dot_dimension_numbers<[1], [0], [0], [1], [0, 0, 1, 1], [], []>} : vector<16x128xf32>, vector<128x128xf32>, vector<16x128xf32> -> vector<16x128xf32>
    %80 = vector.broadcast %78 : vector<1x128xf32> to vector<16x128xf32>
    %81 = arith.addf %79, %80 : vector<16x128xf32>
    %c0_31 = arith.constant 0 : index
    %c768 = arith.constant 768 : index
    %82 = vector.load %arg3[%c0_31, %c768] : memref<16x896xf32, #tpu.memory_space<vmem>>, vector<16x128xf32>
    tpu.vector_store %arg3[%c0_31, %c768], %81 {strides = array<i32>} : memref<16x896xf32, #tpu.memory_space<vmem>>, vector<16x128xf32>,
    return
  }
}

</mosaic_0001>

<llo_original>
// kernel: model_forward.1
$region0: #{model_forward.1}
  #allocation0 [shape = 'u32[]', space=smem, size = 0x4, offset = 0x4, fixed_abs, tag = 'smem constant byte address 0x4 - core index']
  #allocation1 [shape = 'u32[144,128]{1,0:T(1,128)}', space=vmem, size = 0x12000, scoped, tag = 'internal scratch']
  %s0 = inlined_call_operand.vmem [shape: f32[16,128], index: 0, kind: input, shape index: {}]
  %s1 = inlined_call_operand.hbm [shape: f32[3,128,128], index: 1, kind: input, shape index: {}]
  %s2 = inlined_call_operand.vmem [shape: f32[8,128], index: 2, kind: input, shape index: {}]
  %s3 = inlined_call_operand.vmem [shape: f32[16,896], index: 3, kind: output, shape index: {}]
  %s4 = sld [smem:[#allocation0]]
  $region26: #{model_forward.1} parent=0
    _
  %s6 = ssub.s32 1, %s4
  %s7 = scalar_select 0, %s6, %s4
  $region1: #{model_forward.1} parent=0
    #allocation2 [shape = 'u8[196608]{0}', space=vmem, size = 0x30000, scoped, tag = 'input window, operand 1, single buffered']
    #allocation3 [shape = 's32[1]{0}', space=sflag, size = 0x4, scoped, tag = 'scoped memory for model_forward.1']
    %8 = vsyncpa [#allocation3], 0
    // Predicated region
    $region2: #{model_forward.1} parent=1 // pred_check
      _
    $region3: #{model_forward.1} parent=1 // pred_check_branch
      %10 = sbr.rel (0) target = $region5
    $region4: #{model_forward.1} parent=1 // pred_region
      _
    $region5: #{model_forward.1} parent=1 // pred_fallthru
      _
    // Predicated region
    $region6: #{model_forward.1} parent=1 // pred_check
      _
    $region7: #{model_forward.1} parent=1 // pred_check_branch
      %12 = sbr.rel (0) target = $region9
    $region8: #{model_forward.1} parent=1 // pred_region
      %s14 = ssub.s32 6144, 6144
      %15 = vsyncadd [#allocation3], %s14
      %s16 = sshll.u32 [#allocation2], 4
      %s17 = int_to_ptr.vmem [resolvable:$true] %s16
      %22 = dma.hbm_to_vmem [thread:$0]  %s1, 6144, %s17, [#allocation3], 128, 128, 8
    $region9: #{model_forward.1} parent=1 // pred_fallthru
      _
    // Predicated region
    $region10: #{model_forward.1} parent=1 // pred_check
      _
    $region11: #{model_forward.1} parent=1 // pred_check_branch
      %24 = sbr.rel (0) target = $region13
    $region12: #{model_forward.1} parent=1 // pred_region
      _
    $region13: #{model_forward.1} parent=1 // pred_fallthru
      _
    // Predicated region
    $region14: #{model_forward.1} parent=1 // pred_check
      _
    $region15: #{model_forward.1} parent=1 // pred_check_branch
      %26 = sbr.rel (0) target = $region17
    $region16: #{model_forward.1} parent=1 // pred_region
      %27 = dma.done [#allocation3], 6144
    $region17: #{model_forward.1} parent=1 // pred_fallthru
      _
    %v28 = vld [vmem:[%s2] sm:$0xff]
    %v29 = vld [vmem:[%s0] sm:$0xff]
    %v30 = vld [vmem:[%s0 + $0x8] sm:$0xff]
    %v31 = vld [vmem:[#allocation2] sm:$0xff]
    %v32 = vld [vmem:[#allocation2 + $0x8] sm:$0xff]
    %v33 = vld [vmem:[#allocation2 + $0x10] sm:$0xff]
    %v34 = vld [vmem:[#allocation2 + $0x18] sm:$0xff]
    %v35 = vld [vmem:[#allocation2 + $0x20] sm:$0xff]
    %v36 = vld [vmem:[#allocation2 + $0x28] sm:$0xff]
    %v37 = vld [vmem:[#allocation2 + $0x30] sm:$0xff]
    %v38 = vld [vmem:[#allocation2 + $0x38] sm:$0xff]
    %v39 = vld [vmem:[#allocation2 + $0x40] sm:$0xff]
    %v40 = vld [vmem:[#allocation2 + $0x48] sm:$0xff]
    %v41 = vld [vmem:[#allocation2 + $0x50] sm:$0xff]
    %v42 = vld [vmem:[#allocation2 + $0x58] sm:$0xff]
    %v43 = vld [vmem:[#allocation2 + $0x60] sm:$0xff]
    %v44 = vld [vmem:[#allocation2 + $0x68] sm:$0xff]
    %v45 = vld [vmem:[#allocation2 + $0x70] sm:$0xff]
    %v46 = vld [vmem:[#allocation2 + $0x78] sm:$0xff]
    %v47 = vlaneseq
    %v48 = vshrl.u32 %v47, 7
    %v49 = vsub.s32 0, %v48
    %v50 = vrot.slane %v28, %v49
    %51 = vmatprep.subr.mxu0 0.0
    %52 = vmatpush1.msra.mxu0 %v31
    %53 = vmatprep.subr.mxu0 0.0
    %54 = vmatpush1.msra.mxu0 %v32
    %55 = vmatprep.subr.mxu0 0.0
    %56 = vmatpush1.msra.mxu0 %v33
    %57 = vmatprep.subr.mxu0 0.0
    %58 = vmatpush1.msra.mxu0 %v34
    %59 = vmatprep.subr.mxu0 0.0
    %60 = vmatpush1.msra.mxu0 %v35
    %61 = vmatprep.subr.mxu0 0.0
    %62 = vmatpush1.msra.mxu0 %v36
    %63 = vmatprep.subr.mxu0 0.0
    %64 = vmatpush1.msra.mxu0 %v37
    %65 = vmatprep.subr.mxu0 0.0
    %66 = vmatpush1.msra.mxu0 %v38
    %67 = vmatprep.subr.mxu0 0.0
    %68 = vmatpush1.msra.mxu0 %v39
    %69 = vmatprep.subr.mxu0 0.0
    %70 = vmatpush1.msra.mxu0 %v40
    %71 = vmatprep.subr.mxu0 0.0
    %72 = vmatpush1.msra.mxu0 %v41
    %73 = vmatprep.subr.mxu0 0.0
    %74 = vmatpush1.msra.mxu0 %v42
    %75 = vmatprep.subr.mxu0 0.0
    %76 = vmatpush1.msra.mxu0 %v43
    %77 = vmatprep.subr.mxu0 0.0
    %78 = vmatpush1.msra.mxu0 %v44
    %79 = vmatprep.subr.mxu0 0.0
    %80 = vmatpush1.msra.mxu0 %v45
    %81 = vmatprep.subr.mxu0 0.0
    %82 = vmatpush1.msra.mxu0 %v46
    %83 = vmatprep.subr.mxu0 0.0
    %84 = vmatpush1.msra.mxu0 0.0
    %85 = vmatprep.subr.mxu0 0.0
    %86 = vmatpush1.msra.mxu0 0.0
    %87 = vmatprep.subr.mxu0 0.0
    %88 = vmatpush1.msra.mxu0 0.0
    %89 = vmatprep.subr.mxu0 0.0
    %90 = vmatpush1.msra.mxu0 0.0
    %91 = vmatprep.subr.mxu0 0.0
    %92 = vmatpush1.msra.mxu0 0.0
    %93 = vmatprep.subr.mxu0 0.0
    %94 = vmatpush1.msra.mxu0 0.0
    %95 = vmatprep.subr.mxu0 0.0
    %96 = vmatpush1.msra.mxu0 0.0
    %97 = vmatprep.subr.mxu0 0.0
    %98 = vmatpush1.msra.mxu0 0.0
    %99 = vmatprep.subr.mxu0 0.0
    %100 = vmatpush1.msra.mxu0 0.0
    %101 = vmatprep.subr.mxu0 0.0
    %102 = vmatpush1.msra.mxu0 0.0
    %103 = vmatprep.subr.mxu0 0.0
    %104 = vmatpush1.msra.mxu0 0.0
    %105 = vmatprep.subr.mxu0 0.0
    %106 = vmatpush1.msra.mxu0 0.0
    %107 = vmatprep.subr.mxu0 0.0
    %108 = vmatpush1.msra.mxu0 0.0
    %109 = vmatprep.subr.mxu0 0.0
    %110 = vmatpush1.msra.mxu0 0.0
    %111 = vmatprep.subr.mxu0 0.0
    %112 = vmatpush1.msra.mxu0 0.0
    %113 = vmatprep.subr.mxu0 0.0
    %114 = vmatpush1.msra.mxu0 0.0
    %115 = vmatprep.mubr.f32.mxu0 0.0
    %116 = vmatmul.mubr.f32.gmra.mrb[0].mxu0 %v29
    %v117 = vpop.f32.mrb[0].mxu0
    %v118 = vadd.f32 %v50, %v117
    %v119 = vpop.f32.mrb[0].mxu0
    %120 = vmatprep.mubr.f32.mxu0 0.0
    %121 = vmatmul.mubr.f32.gmra.mrb[0].mxu0 %v30
    %v122 = vpop.f32.mrb[0].mxu0
    %v123 = vadd.f32 %v50, %v122
    %v124 = vpop.f32.mrb[0].mxu0
    %125 = vdwg.mxu0
    %126 = vst [vmem:[%s3] sm:$0xff] %v118
    %127 = vst [vmem:[%s3 + $0x38] sm:$0xff] %v123
    %v128 = vmax.f32 %v118, 0.0
    %v129 = vmax.f32 %v123, 0.0
    %130 = vst [vmem:[%s3 + $0x8] sm:$0xff] %v128
    %131 = vst [vmem:[%s3 + $0x40] sm:$0xff] %v129
    %v132 = vmul.f32 %v128, %v128
    %v133 = vmul.f32 %v129, %v129
    %v134 = vadd.f32 %v128, %v129
    %v135 = vrot.slane %v134, 4
    %v136 = vadd.f32 %v134, %v135
    %v137 = vrot.slane %v136, 2
    %v138 = vadd.f32 %v136, %v137
    %v139 = vrot.slane %v138, 1
    %v140 = vadd.f32 %v138, %v139
    %v141 = vadd.f32 %v132, %v133
    %v142 = vrot.slane %v141, 4
    %v143 = vadd.f32 %v141, %v142
    %v144 = vrot.slane %v143, 2
    %v145 = vadd.f32 %v143, %v144
    %v146 = vrot.slane %v145, 1
    %v147 = vadd.f32 %v145, %v146
    %v148 = vmul.f32 %v140, 0.0625
    %v149 = vmul.f32 %v147, 0.0625
    %v150 = vmul.f32 %v148, %v148
    %v151 = vsub.f32 %v149, %v150
    %v152 = vmax.f32 %v151, 0.0
    %v153 = vadd.f32 %v152, 1e-05
    %v154 = vrsqrt.pop %v153
    %v155 = vmul.f32 %v28, %v154
    %v156 = vmul.f32 %v148, %v155
    %v158 = vrot.slane %v156, 7
    %v160 = vsub.f32 %v28, %v158
    %v161 = vlaneseq
    %v162 = vshrl.u32 %v161, 7
    %v163 = vsub.s32 1, %v162
    %v164 = vrot.slane %v155, %v163
    %v165 = vmul.f32 %v128, %v164
    %v166 = vmul.f32 %v129, %v164
    %v167 = vlaneseq
    %v168 = vshrl.u32 %v167, 7
    %v169 = vsub.s32 2, %v168
    %v170 = vrot.slane %v160, %v169
    %v171 = vadd.f32 %v165, %v170
    %v172 = vadd.f32 %v166, %v170
    %173 = vst [vmem:[%s3 + $0x10] sm:$0xff] %v171
    %174 = vst [vmem:[%s3 + $0x48] sm:$0xff] %v172
    %s175 = scalar_lea.vmem [#allocation2], 128
    %v176 = vld [vmem:[%s175] sm:$0xff]
    %v177 = vld [vmem:[%s175 + $0x8] sm:$0xff]
    %v178 = vld [vmem:[%s175 + $0x10] sm:$0xff]
    %v179 = vld [vmem:[%s175 + $0x18] sm:$0xff]
    %v180 = vld [vmem:[%s175 + $0x20] sm:$0xff]
    %v181 = vld [vmem:[%s175 + $0x28] sm:$0xff]
    %v182 = vld [vmem:[%s175 + $0x30] sm:$0xff]
    %v183 = vld [vmem:[%s175 + $0x38] sm:$0xff]
    %v184 = vld [vmem:[%s175 + $0x40] sm:$0xff]
    %v185 = vld [vmem:[%s175 + $0x48] sm:$0xff]
    %v186 = vld [vmem:[%s175 + $0x50] sm:$0xff]
    %v187 = vld [vmem:[%s175 + $0x58] sm:$0xff]
    %v188 = vld [vmem:[%s175 + $0x60] sm:$0xff]
    %v189 = vld [vmem:[%s175 + $0x68] sm:$0xff]
    %v190 = vld [vmem:[%s175 + $0x70] sm:$0xff]
    %v191 = vld [vmem:[%s175 + $0x78] sm:$0xff]
    %v192 = vlaneseq
    %v193 = vshrl.u32 %v192, 7
    %v194 = vsub.s32 3, %v193
    %v195 = vrot.slane %v28, %v194
    %196 = vmatprep.subr.mxu0 0.0
    %197 = vmatpush1.msra.mxu0 %v176
    %198 = vmatprep.subr.mxu0 0.0
    %199 = vmatpush1.msra.mxu0 %v177
    %200 = vmatprep.subr.mxu0 0.0
    %201 = vmatpush1.msra.mxu0 %v178
    %202 = vmatprep.subr.mxu0 0.0
    %203 = vmatpush1.msra.mxu0 %v179
    %204 = vmatprep.subr.mxu0 0.0
    %205 = vmatpush1.msra.mxu0 %v180
    %206 = vmatprep.subr.mxu0 0.0
    %207 = vmatpush1.msra.mxu0 %v181
    %208 = vmatprep.subr.mxu0 0.0
    %209 = vmatpush1.msra.mxu0 %v182
    %210 = vmatprep.subr.mxu0 0.0
    %211 = vmatpush1.msra.mxu0 %v183
    %212 = vmatprep.subr.mxu0 0.0
    %213 = vmatpush1.msra.mxu0 %v184
    %214 = vmatprep.subr.mxu0 0.0
    %215 = vmatpush1.msra.mxu0 %v185
    %216 = vmatprep.subr.mxu0 0.0
    %217 = vmatpush1.msra.mxu0 %v186
    %218 = vmatprep.subr.mxu0 0.0
    %219 = vmatpush1.msra.mxu0 %v187
    %220 = vmatprep.subr.mxu0 0.0
    %221 = vmatpush1.msra.mxu0 %v188
    %222 = vmatprep.subr.mxu0 0.0
    %223 = vmatpush1.msra.mxu0 %v189
    %224 = vmatprep.subr.mxu0 0.0
    %225 = vmatpush1.msra.mxu0 %v190
    %226 = vmatprep.subr.mxu0 0.0
    %227 = vmatpush1.msra.mxu0 %v191
    %228 = vmatprep.subr.mxu0 0.0
    %229 = vmatpush1.msra.mxu0 0.0
    %230 = vmatprep.subr.mxu0 0.0
    %231 = vmatpush1.msra.mxu0 0.0
    %232 = vmatprep.subr.mxu0 0.0
    %233 = vmatpush1.msra.mxu0 0.0
    %234 = vmatprep.subr.mxu0 0.0
    %235 = vmatpush1.msra.mxu0 0.0
    %236 = vmatprep.subr.mxu0 0.0
    %237 = vmatpush1.msra.mxu0 0.0
    %238 = vmatprep.subr.mxu0 0.0
    %239 = vmatpush1.msra.mxu0 0.0
    %240 = vmatprep.subr.mxu0 0.0
    %241 = vmatpush1.msra.mxu0 0.0
    %242 = vmatprep.subr.mxu0 0.0
    %243 = vmatpush1.msra.mxu0 0.0
    %244 = vmatprep.subr.mxu0 0.0
    %245 = vmatpush1.msra.mxu0 0.0
    %246 = vmatprep.subr.mxu0 0.0
    %247 = vmatpush1.msra.mxu0 0.0
    %248 = vmatprep.subr.mxu0 0.0
    %249 = vmatpush1.msra.mxu0 0.0
    %250 = vmatprep.subr.mxu0 0.0
    %251 = vmatpush1.msra.mxu0 0.0
    %252 = vmatprep.subr.mxu0 0.0
    %253 = vmatpush1.msra.mxu0 0.0
    %254 = vmatprep.subr.mxu0 0.0
    %255 = vmatpush1.msra.mxu0 0.0
    %256 = vmatprep.subr.mxu0 0.0
    %257 = vmatpush1.msra.mxu0 0.0
    %258 = vmatprep.subr.mxu0 0.0
    %259 = vmatpush1.msra.mxu0 0.0
    %260 = vmatprep.mubr.f32.mxu0 0.0
    %261 = vmatmul.mubr.f32.gmra.mrb[0].mxu0 %v171
    %v262 = vpop.f32.mrb[0].mxu0
    %v263 = vadd.f32 %v195, %v262
    %v264 = vpop.f32.mrb[0].mxu0
    %265 = vmatprep.mubr.f32.mxu0 0.0
    %266 = vmatmul.mubr.f32.gmra.mrb[0].mxu0 %v172
    %v267 = vpop.f32.mrb[0].mxu0
    %v268 = vadd.f32 %v195, %v267
    %v269 = vpop.f32.mrb[0].mxu0
    %270 = vdwg.mxu0
    %271 = vst [vmem:[%s3 + $0x18] sm:$0xff] %v263
    %272 = vst [vmem:[%s3 + $0x50] sm:$0xff] %v268
    %v273 = vmax.f32 %v263, 0.0
    %v274 = vmax.f32 %v268, 0.0
    %275 = vst [vmem:[%s3 + $0x20] sm:$0xff] %v273
    %276 = vst [vmem:[%s3 + $0x58] sm:$0xff] %v274
    %v277 = vmul.f32 %v273, %v273
    %v278 = vmul.f32 %v274, %v274
    %v279 = vadd.f32 %v273, %v274
    %v280 = vrot.slane %v279, 4
    %v281 = vadd.f32 %v279, %v280
    %v282 = vrot.slane %v281, 2
    %v283 = vadd.f32 %v281, %v282
    %v284 = vrot.slane %v283, 1
    %v285 = vadd.f32 %v283, %v284
    %v286 = vadd.f32 %v277, %v278
    %v287 = vrot.slane %v286, 4
    %v288 = vadd.f32 %v286, %v287
    %v289 = vrot.slane %v288, 2
    %v290 = vadd.f32 %v288, %v289
    %v291 = vrot.slane %v290, 1
    %v292 = vadd.f32 %v290, %v291
    %v293 = vmul.f32 %v285, 0.0625
    %v294 = vmul.f32 %v292, 0.0625
    %v295 = vmul.f32 %v293, %v293
    %v296 = vsub.f32 %v294, %v295
    %v297 = vmax.f32 %v296, 0.0
    %v298 = vadd.f32 %v297, 1e-05
    %v299 = vrsqrt.pop %v298
    %v300 = vmul.f32 %v28, %v299
    %v301 = vmul.f32 %v293, %v300
    %v303 = vrot.slane %v301, 7
    %v305 = vsub.f32 %v28, %v303
    %v306 = vlaneseq
    %v307 = vshrl.u32 %v306, 7
    %v308 = vsub.s32 4, %v307
    %v309 = vrot.slane %v300, %v308
    %v310 = vmul.f32 %v273, %v309
    %v311 = vmul.f32 %v274, %v309
    %v312 = vlaneseq
    %v313 = vshrl.u32 %v312, 7
    %v314 = vsub.s32 5, %v313
    %v315 = vrot.slane %v305, %v314
    %v316 = vadd.f32 %v310, %v315
    %v317 = vadd.f32 %v311, %v315
    %318 = vst [vmem:[%s3 + $0x28] sm:$0xff] %v316
    %319 = vst [vmem:[%s3 + $0x60] sm:$0xff] %v317
    %s320 = scalar_lea.vmem [#allocation2], 256
    %v321 = vld [vmem:[%s320] sm:$0xff]
    %v322 = vld [vmem:[%s320 + $0x8] sm:$0xff]
    %v323 = vld [vmem:[%s320 + $0x10] sm:$0xff]
    %v324 = vld [vmem:[%s320 + $0x18] sm:$0xff]
    %v325 = vld [vmem:[%s320 + $0x20] sm:$0xff]
    %v326 = vld [vmem:[%s320 + $0x28] sm:$0xff]
    %v327 = vld [vmem:[%s320 + $0x30] sm:$0xff]
    %v328 = vld [vmem:[%s320 + $0x38] sm:$0xff]
    %v329 = vld [vmem:[%s320 + $0x40] sm:$0xff]
    %v330 = vld [vmem:[%s320 + $0x48] sm:$0xff]
    %v331 = vld [vmem:[%s320 + $0x50] sm:$0xff]
    %v332 = vld [vmem:[%s320 + $0x58] sm:$0xff]
    %v333 = vld [vmem:[%s320 + $0x60] sm:$0xff]
    %v334 = vld [vmem:[%s320 + $0x68] sm:$0xff]
    %v335 = vld [vmem:[%s320 + $0x70] sm:$0xff]
    %v336 = vld [vmem:[%s320 + $0x78] sm:$0xff]
    %v337 = vlaneseq
    %v338 = vshrl.u32 %v337, 7
    %v339 = vsub.s32 6, %v338
    %v340 = vrot.slane %v28, %v339
    %341 = vmatprep.subr.mxu0 0.0
    %342 = vmatpush1.msra.mxu0 %v321
    %343 = vmatprep.subr.mxu0 0.0
    %344 = vmatpush1.msra.mxu0 %v322
    %345 = vmatprep.subr.mxu0 0.0
    %346 = vmatpush1.msra.mxu0 %v323
    %347 = vmatprep.subr.mxu0 0.0
    %348 = vmatpush1.msra.mxu0 %v324
    %349 = vmatprep.subr.mxu0 0.0
    %350 = vmatpush1.msra.mxu0 %v325
    %351 = vmatprep.subr.mxu0 0.0
    %352 = vmatpush1.msra.mxu0 %v326
    %353 = vmatprep.subr.mxu0 0.0
    %354 = vmatpush1.msra.mxu0 %v327
    %355 = vmatprep.subr.mxu0 0.0
    %356 = vmatpush1.msra.mxu0 %v328
    %357 = vmatprep.subr.mxu0 0.0
    %358 = vmatpush1.msra.mxu0 %v329
    %359 = vmatprep.subr.mxu0 0.0
    %360 = vmatpush1.msra.mxu0 %v330
    %361 = vmatprep.subr.mxu0 0.0
    %362 = vmatpush1.msra.mxu0 %v331
    %363 = vmatprep.subr.mxu0 0.0
    %364 = vmatpush1.msra.mxu0 %v332
    %365 = vmatprep.subr.mxu0 0.0
    %366 = vmatpush1.msra.mxu0 %v333
    %367 = vmatprep.subr.mxu0 0.0
    %368 = vmatpush1.msra.mxu0 %v334
    %369 = vmatprep.subr.mxu0 0.0
    %370 = vmatpush1.msra.mxu0 %v335
    %371 = vmatprep.subr.mxu0 0.0
    %372 = vmatpush1.msra.mxu0 %v336
    %373 = vmatprep.subr.mxu0 0.0
    %374 = vmatpush1.msra.mxu0 0.0
    %375 = vmatprep.subr.mxu0 0.0
    %376 = vmatpush1.msra.mxu0 0.0
    %377 = vmatprep.subr.mxu0 0.0
    %378 = vmatpush1.msra.mxu0 0.0
    %379 = vmatprep.subr.mxu0 0.0
    %380 = vmatpush1.msra.mxu0 0.0
    %381 = vmatprep.subr.mxu0 0.0
    %382 = vmatpush1.msra.mxu0 0.0
    %383 = vmatprep.subr.mxu0 0.0
    %384 = vmatpush1.msra.mxu0 0.0
    %385 = vmatprep.subr.mxu0 0.0
    %386 = vmatpush1.msra.mxu0 0.0
    %387 = vmatprep.subr.mxu0 0.0
    %388 = vmatpush1.msra.mxu0 0.0
    %389 = vmatprep.subr.mxu0 0.0
    %390 = vmatpush1.msra.mxu0 0.0
    %391 = vmatprep.subr.mxu0 0.0
    %392 = vmatpush1.msra.mxu0 0.0
    %393 = vmatprep.subr.mxu0 0.0
    %394 = vmatpush1.msra.mxu0 0.0
    %395 = vmatprep.subr.mxu0 0.0
    %396 = vmatpush1.msra.mxu0 0.0
    %397 = vmatprep.subr.mxu0 0.0
    %398 = vmatpush1.msra.mxu0 0.0
    %399 = vmatprep.subr.mxu0 0.0
    %400 = vmatpush1.msra.mxu0 0.0
    %401 = vmatprep.subr.mxu0 0.0
    %402 = vmatpush1.msra.mxu0 0.0
    %403 = vmatprep.subr.mxu0 0.0
    %404 = vmatpush1.msra.mxu0 0.0
    %405 = vmatprep.mubr.f32.mxu0 0.0
    %406 = vmatmul.mubr.f32.gmra.mrb[0].mxu0 %v316
    %v407 = vpop.f32.mrb[0].mxu0
    %v408 = vadd.f32 %v340, %v407
    %v409 = vpop.f32.mrb[0].mxu0
    %410 = vmatprep.mubr.f32.mxu0 0.0
    %411 = vmatmul.mubr.f32.gmra.mrb[0].mxu0 %v317
    %v412 = vpop.f32.mrb[0].mxu0
    %v413 = vadd.f32 %v340, %v412
    %v414 = vpop.f32.mrb[0].mxu0
    %415 = vdwg.mxu0
    %416 = vst [vmem:[%s3 + $0x30] sm:$0xff] %v408
    %417 = vst [vmem:[%s3 + $0x68] sm:$0xff] %v413
    // Predicated region
    $region18: #{model_forward.1} parent=1 // pred_check
      _
    $region19: #{model_forward.1} parent=1 // pred_check_branch
      %419 = sbr.rel (0) target = $region21
    $region20: #{model_forward.1} parent=1 // pred_region
      _
    $region21: #{model_forward.1} parent=1 // pred_fallthru
      _
    // Predicated region
    $region22: #{model_forward.1} parent=1 // pred_check
      _
    $region23: #{model_forward.1} parent=1 // pred_check_branch
      %421 = sbr.rel (0) target = $region25
    $region24: #{model_forward.1} parent=1 // pred_region
      _
    $region25: #{model_forward.1} parent=1 // pred_fallthru
      _
    %422 = vsyncpa [#allocation3], 1

</llo_original>
